<compile_context>
chip_gen: v7x
topology: tpu7x:2x2x1
jax: 0.10.0
libtpu: 0.0.40
codegen_flags: <defaults>
</compile_context>

<pallas_src>
import jax
import jax.numpy as jnp
from jax.experimental import pallas as pl
from jax.experimental.pallas import tpu as pltpu


def _round_up(x, m):
    return (x + m - 1) // m * m


def _make_kernel(*, n_rows, tn, tc, w):
    n_chunks = tn // tc

    def kernel(x_ref, sel_ref, out_ref, acc_ref):
        # x_ref:   (tn, H*W) block of the flattened input (lane-dense last dim).
        # sel_ref: (H*W, W) bf16 0/1 selector, sel[h*W + w', w] = (w' == w), so
        #          (y @ sel)[r, w] = sum_h y[r, h*W + w]   (the H-reduction).
        # out_ref: (1, 1) SMEM partial sum for this grid step.
        # acc_ref: (1, W) f32 VMEM accumulator, reset every grid step.
        acc_ref[...] = jnp.zeros_like(acc_ref)
        sel = sel_ref[...]                      # resident block; hoisted out of loop
        block_row0 = pl.program_id(0) * tn

        def chunk(c, carry):
            r0 = pl.multiple_of(c * tc, tc)
            y = x_ref[pl.ds(r0, tc), :].astype(jnp.float32)            # (tc, H*W)
            y0 = jnp.abs(y).astype(jnp.bfloat16)                       # |a|
            y1 = jnp.abs(y - 1.0).astype(jnp.bfloat16)                 # |a - 1|
            s0 = jnp.dot(y0, sel, preferred_element_type=jnp.float32)  # (tc, W)
            s1 = jnp.dot(y1, sel, preferred_element_type=jnp.float32)  # (tc, W)
            m = jnp.minimum(s0, s1)
            # Ragged tail: zero the contribution of rows >= N (no host-side pad).
            rid = block_row0 + c * tc + jax.lax.broadcasted_iota(
                jnp.int32, (tc, w), 0)
            m = jnp.where(rid < n_rows, m, 0.0)
            acc_ref[...] += jnp.sum(m, axis=0, keepdims=True)
            return carry

        jax.lax.fori_loop(0, n_chunks, chunk, 0)
        out_ref[0, 0] = jnp.sum(acc_ref[...])

    return kernel


def mask_tc_loss(a, *, target_block_bytes=8 * 1024 * 1024,
                 target_chunk_bytes=512 * 1024):
    """a: (B, C, H, W) float array.  Returns the scalar float32 loss."""
    B, C, H, W = a.shape
    N = B * C
    HW = H * W
    x = a.reshape(N, HW)          # contiguous reshape; permute absorbed into the
                                  # lane-strided H reduction
    itemsize = jnp.dtype(a.dtype).itemsize
    row_bytes = HW * itemsize
    # Sublane packing granularity: 8 rows for 4-byte, 16 for bf16, 32 for 8-bit.
    sub = max(8, 32 // itemsize)

    if N <= sub or N * row_bytes <= 2 * 1024 * 1024:
        # Whole problem is tiny: one block, one chunk (block dims == array dims).
        tc = tn = N
    else:
        # Compute chunk: bounded in-kernel working set, multiple of sublane pack.
        tc = max(sub, min(1024, target_chunk_bytes // row_bytes) // sub * sub)
        tc = min(tc, N // sub * sub)
        # DMA block: multiple of tc, ~target_block_bytes, never larger than N.
        tn = tc * max(1, target_block_bytes // (tc * row_bytes))
        tn = min(tn, N // tc * tc)
        # Megacore (v7x): keep >= 2 grid blocks when N allows so
        # dimension_semantics=("parallel",) can use both TensorCores.
        if pl.cdiv(N, tn) == 1 and pl.cdiv(N, tc) >= 2:
            tn = min(_round_up(pl.cdiv(N, 2), tc), N // tc * tc)

    num_blocks = pl.cdiv(N, tn)
    n_chunks = tn // tc

    # 0/1 selector: sel[h*W + w', w] = (w' == w); exact in bf16, half the f32
    # footprint.  (For very large W, replace the matmul with a lane-fold.)
    sel = jnp.tile(jnp.eye(W, dtype=jnp.bfloat16), (H, 1))    # (H*W, W)

    # Explicit VMEM budget: 2x double-buffered input block + resident selector
    # + chunk-sized temporaries (y, |y|, |y-1|, bf16 copies, s0/s1) + headroom.
    block_bytes = tn * row_bytes
    chunk_f32_bytes = tc * HW * 4
    sel_bytes = HW * W * 2
    vmem_limit = int(2 * block_bytes + 2 * sel_bytes + 8 * chunk_f32_bytes
                     + (2 << 20))
    vmem_limit = min(vmem_limit, 96 * 1024 * 1024)

    cost = pl.CostEstimate(
        flops=int(3 * N * HW + 4 * N * HW * W + 2 * N * W),
        transcendentals=0,
        bytes_accessed=int(N * HW * itemsize + sel_bytes + num_blocks * 4),
    )

    kernel = _make_kernel(n_rows=N, tn=tn, tc=tc, w=W)
    partials = pl.pallas_call(
        kernel,
        out_shape=jax.ShapeDtypeStruct((num_blocks, 1), jnp.float32),
        grid=(num_blocks,),
        in_specs=[
            pl.BlockSpec((tn, HW), lambda i: (i, 0)),
            pl.BlockSpec((HW, W), lambda i: (0, 0)),   # constant block, stays resident
        ],
        out_specs=pl.BlockSpec((1, 1), lambda i: (i, 0), memory_space=pltpu.SMEM),
        scratch_shapes=[pltpu.VMEM((1, W), jnp.float32)],
        compiler_params=pltpu.CompilerParams(
            dimension_semantics=("parallel",),
            vmem_limit_bytes=vmem_limit,
        ),
        cost_estimate=cost,
    )(x, sel)

    # mean over (B, C, W) of min(mean_H|a|, mean_H|a-1|); the 1/H of the two
    # means and the final 1/(N*W) are folded into a single divide.
    return jnp.sum(partials) / jnp.float32(N * W * H)


def mask_tc_loss_ref(a):
    a = jnp.transpose(a, (0, 1, 3, 2))
    a0 = jnp.mean(jnp.abs(a), axis=-1)
    a1 = jnp.mean(jnp.abs(a - 1.0), axis=-1)
    return jnp.mean(jnp.minimum(a0, a1))


if __name__ == "__main__":
    key = jax.random.PRNGKey(0)
    B, C, H, W = 2, 4, 16, 16
    a = jax.random.uniform(key, (B, C, H, W), dtype=jnp.float32) * 2.0 - 0.5

    out = jax.block_until_ready(mask_tc_loss(a))
    ref = jax.block_until_ready(mask_tc_loss_ref(a))

    # The MXU H-reduction uses bf16 operands (TPU's default matmul precision
    # made explicit); allow a modest tolerance vs. the pure-f32 reference.
    assert jnp.allclose(out, ref, atol=1e-4, rtol=1e-4), (out, ref)
    print("KERNEL_OK")
</pallas_src>

<mosaic_0001>
module attributes {stable_mosaic.version = 11 : i64} {
  func.func @kernel(%arg0: i32, %arg1: memref<8x256xf32, #tpu.memory_space<vmem>>, %arg2: memref<256x16xbf16, #tpu.memory_space<vmem>>, %arg3: memref<1x1xf32, #tpu.memory_space<smem>>, %arg4: memref<1x16xf32, #tpu.memory_space<vmem>>) attributes {dimension_semantics = [#tpu.dimension_semantics<parallel>], iteration_bounds = array<i64: 1>, scalar_prefetch = 0 : i64, scratch_operands = 1 : i64, tpu.core_type = #tpu.core_type<tc>, window_params = [{transform_indices = @transform_0, window_bounds = array<i64: 8, 256>}, {pipeline_mode = #tpu.pipeline_mode<synchronous>, transform_indices = @transform_1, window_bounds = array<i64: 256, 16>}, {transform_indices = @transform_2, window_bounds = array<i64: 1, 1>}]} {
    %cst = arith.constant 0.000000e+00 : f32
    %0 = vector.broadcast %cst : f32 to vector<1x16xf32>
    %c0 = arith.constant 0 : index
    %c0_0 = arith.constant 0 : index
    %1 = vector.load %arg4[%c0, %c0_0] : memref<1x16xf32, #tpu.memory_space<vmem>>, vector<1x16xf32>
    tpu.vector_store %arg4[%c0, %c0_0], %0 {strides = array<i32>} : memref<1x16xf32, #tpu.memory_space<vmem>>, vector<1x16xf32>,
    %c0_1 = arith.constant 0 : index
    %c0_2 = arith.constant 0 : index
    %2 = vector.load %arg2[%c0_1, %c0_2] : memref<256x16xbf16, #tpu.memory_space<vmem>>, vector<256x16xbf16>
    %c8_i32 = arith.constant 8 : i32
    %3 = arith.muli %arg0, %c8_i32 : i32
    %c0_i32 = arith.constant 0 : i32
    %c8_i32_3 = arith.constant 8 : i32
    %4 = arith.muli %c0_i32, %c8_i32_3 : i32
    %5 = tpu.assume_multiple %4, 8 : i32
    %6 = arith.index_cast %5 : i32 to index
    %c0_4 = arith.constant 0 : index
    %7 = vector.load %arg1[%6, %c0_4] : memref<8x256xf32, #tpu.memory_space<vmem>>, vector<8x256xf32>
    %8 = math.absf %7 : vector<8x256xf32>
    %9 = arith.truncf %8 : vector<8x256xf32> to vector<8x256xbf16>
    %cst_5 = arith.constant 1.000000e+00 : f32
    %10 = vector.broadcast %cst_5 : f32 to vector<8x256xf32>
    %11 = arith.subf %7, %10 : vector<8x256xf32>
    %12 = math.absf %11 : vector<8x256xf32>
    %13 = arith.truncf %12 : vector<8x256xf32> to vector<8x256xbf16>
    %cst_6 = arith.constant dense<0.000000e+00> : vector<8x16xf32>
    %14 = tpu.matmul %9, %2, %cst_6 {dimension_numbers = #tpu.dot_dimension_numbers<[1], [0], [0], [1], [0, 0, 1, 1], [], []>} : vector<8x256xbf16>, vector<256x16xbf16>, vector<8x16xf32> -> vector<8x16xf32>
    %cst_7 = arith.constant dense<0.000000e+00> : vector<8x16xf32>
    %15 = tpu.matmul %13, %2, %cst_7 {dimension_numbers = #tpu.dot_dimension_numbers<[1], [0], [0], [1], [0, 0, 1, 1], [], []>} : vector<8x256xbf16>, vector<256x16xbf16>, vector<8x16xf32> -> vector<8x16xf32>
    %16 = arith.minimumf %14, %15 : vector<8x16xf32>
    %c8_i32_8 = arith.constant 8 : i32
    %17 = arith.muli %c0_i32, %c8_i32_8 : i32
    %18 = arith.addi %3, %17 : i32
    %19 = tpu.iota {dimensions = array<i32: 0>} : vector<8x16xi32>
    %20 = vector.broadcast %18 : i32 to vector<8x16xi32>
    %21 = arith.addi %20, %19 : vector<8x16xi32>
    %c8_i32_9 = arith.constant 8 : i32
    %22 = vector.broadcast %c8_i32_9 : i32 to vector<8x16xi32>
    %23 = arith.cmpi slt, %21, %22 : vector<8x16xi32>
    %cst_10 = arith.constant 0.000000e+00 : f32
    %24 = vector.broadcast %cst_10 : f32 to vector<8x16xf32>
    %25 = arith.select %23, %16, %24 : vector<8x16xi1>, vector<8x16xf32>
    %c0_11 = arith.constant 0 : index
    %c0_12 = arith.constant 0 : index
    %26 = vector.load %arg4[%c0_11, %c0_12] : memref<1x16xf32, #tpu.memory_space<vmem>>, vector<1x16xf32>
    %cst_13 = arith.constant dense<0.000000e+00> : vector<16xf32>
    %27 = vector.multi_reduction <add>, %25, %cst_13 [0] : vector<8x16xf32> to vector<16xf32>
    %28 = vector.shape_cast %27 : vector<16xf32> to vector<1x16xf32>
    %29 = arith.addf %26, %28 : vector<1x16xf32>
    %c0_14 = arith.constant 0 : index
    %c0_15 = arith.constant 0 : index
    %30 = vector.load %arg4[%c0_14, %c0_15] : memref<1x16xf32, #tpu.memory_space<vmem>>, vector<1x16xf32>
    tpu.vector_store %arg4[%c0_14, %c0_15], %29 {strides = array<i32>} : memref<1x16xf32, #tpu.memory_space<vmem>>, vector<1x16xf32>,
    %c1_i32 = arith.constant 1 : i32
    %c0_16 = arith.constant 0 : index
    %c0_17 = arith.constant 0 : index
    %31 = vector.load %arg4[%c0_16, %c0_17] : memref<1x16xf32, #tpu.memory_space<vmem>>, vector<1x16xf32>
    %32 = vector.shape_cast %31 : vector<1x16xf32> to vector<1x1x16xf32>
    %cst_18 = arith.constant dense<0.000000e+00> : vector<1xf32>
    %33 = vector.multi_reduction <add>, %32, %cst_18 [1, 2] : vector<1x1x16xf32> to vector<1xf32>
    %34 = vector.shape_cast %33 : vector<1xf32> to vector<1x1x1xf32>
    %35 = vector.extract %34[0, 0, 0] : f32 from vector<1x1x1xf32>
    %c0_19 = arith.constant 0 : index
    %c0_20 = arith.constant 0 : index
    %36 = memref.load %arg3[%c0_19, %c0_20] : memref<1x1xf32, #tpu.memory_space<smem>>
    memref.store %35, %arg3[%c0_19, %c0_20] : memref<1x1xf32, #tpu.memory_space<smem>>
    return
  }
  func.func @transform_0(%arg0: i32) -> (i32, i32) {
    %c0_i32 = arith.constant 0 : i32
    %c0_i32_0 = arith.constant 0 : i32
    return %arg0, %c0_i32 : i32, i32
  }
  func.func @transform_1(%arg0: i32) -> (i32, i32) {
    %c0_i32 = arith.constant 0 : i32
    %c0_i32_0 = arith.constant 0 : i32
    %c0_i32_1 = arith.constant 0 : i32
    return %c0_i32, %c0_i32_0 : i32, i32
  }
  func.func @transform_2(%arg0: i32) -> (i32, i32) {
    %c0_i32 = arith.constant 0 : i32
    %c0_i32_0 = arith.constant 0 : i32
    return %arg0, %c0_i32 : i32, i32
  }
}

</mosaic_0001>

<llo_original>
// kernel: tpu_custom_call.1
$region0: #{tpu_custom_call.1}
  #allocation0 [shape = 'u32[]', space=smem, size = 0x4, offset = 0x4, fixed_abs, tag = 'smem constant byte address 0x4 - core index']
  #allocation1 [shape = 'u32[144,128]{1,0:T(1,128)}', space=vmem, size = 0x12000, scoped, tag = 'internal scratch']
  #allocation2 [shape = 'f32[1,16]{1,0:T(1,128)}', space=vmem, size = 0x200, scoped, tag = 'scratch operand']
  %s0 = inlined_call_operand.vmem [shape: f32[8,256], index: 0, kind: input, shape index: {}]
  %s1 = inlined_call_operand.vmem [shape: bf16[256,16], index: 1, kind: input, shape index: {}]
  %s2 = inlined_call_operand.hbm [shape: f32[1,1], index: 2, kind: output, shape index: {}]
  %s3 = sld [smem:[#allocation0]]
  $region18: #{tpu_custom_call.1} parent=0
    _
  %s5 = ssub.s32 1, %s3
  %s6 = scalar_select 0, %s5, %s3
  $region1: #{tpu_custom_call.1} parent=0
    #allocation3 [shape = 'u8[512]{0}', space=smem, size = 0x200, scoped, tag = 'output window, operand 0, single buffered']
    #allocation4 [shape = 's32[1]{0}', space=sflag, size = 0x4, scoped, tag = 'scoped memory for tpu_custom_call.1']
    %7 = vsyncpa [#allocation4], 0
    // Predicated region
    $region2: #{tpu_custom_call.1} parent=1 // pred_check
      _
    $region3: #{tpu_custom_call.1} parent=1 // pred_check_branch
      %9 = sbr.rel (0) target = $region5
    $region4: #{tpu_custom_call.1} parent=1 // pred_region
      _
    $region5: #{tpu_custom_call.1} parent=1 // pred_fallthru
      _
    // Predicated region
    $region6: #{tpu_custom_call.1} parent=1 // pred_check
      _
    $region7: #{tpu_custom_call.1} parent=1 // pred_check_branch
      %11 = sbr.rel (0) target = $region9
    $region8: #{tpu_custom_call.1} parent=1 // pred_region
      _
    $region9: #{tpu_custom_call.1} parent=1 // pred_fallthru
      _
    %vm13 = vcmask 122880
    %14 = vst.msk [vmem:[#allocation2] sm:$0x1] %vm13, 0.0
    %v15 = vld [vmem:[%s1] sm:$0xf]
    %v16 = vld [vmem:[%s1 + $0x4] sm:$0xf]
    %v17 = vld [vmem:[%s1 + $0x8] sm:$0xf]
    %v18 = vld [vmem:[%s1 + $0xc] sm:$0xf]
    %v19 = vld [vmem:[%s1 + $0x10] sm:$0xf]
    %v20 = vld [vmem:[%s1 + $0x14] sm:$0xf]
    %v21 = vld [vmem:[%s1 + $0x18] sm:$0xf]
    %v22 = vld [vmem:[%s1 + $0x1c] sm:$0xf]
    %v23 = vld [vmem:[%s1 + $0x20] sm:$0xf]
    %v24 = vld [vmem:[%s1 + $0x24] sm:$0xf]
    %v25 = vld [vmem:[%s1 + $0x28] sm:$0xf]
    %v26 = vld [vmem:[%s1 + $0x2c] sm:$0xf]
    %v27 = vld [vmem:[%s1 + $0x30] sm:$0xf]
    %v28 = vld [vmem:[%s1 + $0x34] sm:$0xf]
    %v29 = vld [vmem:[%s1 + $0x38] sm:$0xf]
    %v30 = vld [vmem:[%s1 + $0x3c] sm:$0xf]
    %v31 = vld [vmem:[%s1 + $0x40] sm:$0xf]
    %v32 = vld [vmem:[%s1 + $0x44] sm:$0xf]
    %v33 = vld [vmem:[%s1 + $0x48] sm:$0xf]
    %v34 = vld [vmem:[%s1 + $0x4c] sm:$0xf]
    %v35 = vld [vmem:[%s1 + $0x50] sm:$0xf]
    %v36 = vld [vmem:[%s1 + $0x54] sm:$0xf]
    %v37 = vld [vmem:[%s1 + $0x58] sm:$0xf]
    %v38 = vld [vmem:[%s1 + $0x5c] sm:$0xf]
    %v39 = vld [vmem:[%s1 + $0x60] sm:$0xf]
    %v40 = vld [vmem:[%s1 + $0x64] sm:$0xf]
    %v41 = vld [vmem:[%s1 + $0x68] sm:$0xf]
    %v42 = vld [vmem:[%s1 + $0x6c] sm:$0xf]
    %v43 = vld [vmem:[%s1 + $0x70] sm:$0xf]
    %v44 = vld [vmem:[%s1 + $0x74] sm:$0xf]
    %v45 = vld [vmem:[%s1 + $0x78] sm:$0xf]
    %v46 = vld [vmem:[%s1 + $0x7c] sm:$0xf]
    %s47 = smul.u32 0, 8
    %s48 = smul.u32 0, 2
    %s49 = smul.addr %s48, 8
    %s50 = scalar_lea.vmem %s0, %s49
    %v51 = vld [vmem:[%s50] sm:$0xff]
    %v52 = vld [vmem:[%s50 + $0x8] sm:$0xff]
    %v53 = vand.u32 2147483647, %v51
    %v54 = vand.u32 2147483647, %v52
    %v55 = vpack.c.bf16 %v53, %v53
    %v56 = vpack.c.bf16 %v54, %v54
    %v57 = vsub.f32 %v51, 1.0
    %v58 = vsub.f32 %v52, 1.0
    %v59 = vand.u32 2147483647, %v57
    %v60 = vand.u32 2147483647, %v58
    %v61 = vpack.c.bf16 %v59, %v59
    %v62 = vpack.c.bf16 %v60, %v60
    %v95 = vunpack.c.l.b16 %v15
    %v96 = vunpack.c.l.b16 %v16
    %v97 = vunpack.c.l.b16 %v17
    %v98 = vunpack.c.l.b16 %v18
    %v99 = vunpack.c.l.b16 %v19
    %v100 = vunpack.c.l.b16 %v20
    %v101 = vunpack.c.l.b16 %v21
    %v102 = vunpack.c.l.b16 %v22
    %v103 = vunpack.c.l.b16 %v23
    %v104 = vunpack.c.l.b16 %v24
    %v105 = vunpack.c.l.b16 %v25
    %v106 = vunpack.c.l.b16 %v26
    %v107 = vunpack.c.l.b16 %v27
    %v108 = vunpack.c.l.b16 %v28
    %v109 = vunpack.c.l.b16 %v29
    %v110 = vunpack.c.l.b16 %v30
    %v111 = vunpack.c.l.b16 %v31
    %v112 = vunpack.c.l.b16 %v32
    %v113 = vunpack.c.l.b16 %v33
    %v114 = vunpack.c.l.b16 %v34
    %v115 = vunpack.c.l.b16 %v35
    %v116 = vunpack.c.l.b16 %v36
    %v117 = vunpack.c.l.b16 %v37
    %v118 = vunpack.c.l.b16 %v38
    %v119 = vunpack.c.l.b16 %v39
    %v120 = vunpack.c.l.b16 %v40
    %v121 = vunpack.c.l.b16 %v41
    %v122 = vunpack.c.l.b16 %v42
    %v123 = vunpack.c.l.b16 %v43
    %v124 = vunpack.c.l.b16 %v44
    %v125 = vunpack.c.l.b16 %v45
    %v126 = vunpack.c.l.b16 %v46
    %v127 = vpack.c.b16 %v96, %v95
    %v128 = vpack.c.b16 %v98, %v97
    %v129 = vpack.c.b16 %v100, %v99
    %v130 = vpack.c.b16 %v102, %v101
    %v131 = vpack.c.b16 %v104, %v103
    %v132 = vpack.c.b16 %v106, %v105
    %v133 = vpack.c.b16 %v108, %v107
    %v134 = vpack.c.b16 %v110, %v109
    %v135 = vpack.c.b16 %v112, %v111
    %v136 = vpack.c.b16 %v114, %v113
    %v137 = vpack.c.b16 %v116, %v115
    %v138 = vpack.c.b16 %v118, %v117
    %v139 = vpack.c.b16 %v120, %v119
    %v140 = vpack.c.b16 %v122, %v121
    %v141 = vpack.c.b16 %v124, %v123
    %v142 = vpack.c.b16 %v126, %v125
    %159 = vmatprep.subr.bf16.mxu0 0
    %160 = vmatpush1.bf16.msra.mxu0 %v127
    %161 = vmatprep.subr.bf16.mxu0 0
    %162 = vmatpush1.bf16.msra.mxu0 %v128
    %163 = vmatprep.subr.bf16.mxu0 0
    %164 = vmatpush1.bf16.msra.mxu0 %v129
    %165 = vmatprep.subr.bf16.mxu0 0
    %166 = vmatpush1.bf16.msra.mxu0 %v130
    %167 = vmatprep.subr.bf16.mxu0 0
    %168 = vmatpush1.bf16.msra.mxu0 %v131
    %169 = vmatprep.subr.bf16.mxu0 0
    %170 = vmatpush1.bf16.msra.mxu0 %v132
    %171 = vmatprep.subr.bf16.mxu0 0
    %172 = vmatpush1.bf16.msra.mxu0 %v133
    %173 = vmatprep.subr.bf16.mxu0 0
    %174 = vmatpush1.bf16.msra.mxu0 %v134
    %175 = vmatprep.subr.bf16.mxu0 0
    %176 = vmatpush1.bf16.msra.mxu0 %v135
    %177 = vmatprep.subr.bf16.mxu0 0
    %178 = vmatpush1.bf16.msra.mxu0 %v136
    %179 = vmatprep.subr.bf16.mxu0 0
    %180 = vmatpush1.bf16.msra.mxu0 %v137
    %181 = vmatprep.subr.bf16.mxu0 0
    %182 = vmatpush1.bf16.msra.mxu0 %v138
    %183 = vmatprep.subr.bf16.mxu0 0
    %184 = vmatpush1.bf16.msra.mxu0 %v139
    %185 = vmatprep.subr.bf16.mxu0 0
    %186 = vmatpush1.bf16.msra.mxu0 %v140
    %187 = vmatprep.subr.bf16.mxu0 0
    %188 = vmatpush1.bf16.msra.mxu0 %v141
    %189 = vmatprep.subr.bf16.mxu0 0
    %190 = vmatpush1.bf16.msra.mxu0 %v142
    %191 = vmatprep.mubr.bf16.mxu0 %v56
    %192 = vmatmul.mubr.bf16.gmra.mrb[0].mxu0 %v55
    %v193 = vpop.f32.mrb[0].mxu0
    %v194 = vadd.f32 0.0, %v193
    %v195 = vpop.f32.mrb[0].mxu0
    %v196 = vpop.f32.mrb[0].mxu0
    %v197 = vpop.f32.mrb[0].mxu0
    %198 = vdwg.mxu0
    %199 = vmatprep.subr.bf16.mxu0 0
    %200 = vmatpush1.bf16.msra.mxu0 %v127
    %201 = vmatprep.subr.bf16.mxu0 0
    %202 = vmatpush1.bf16.msra.mxu0 %v128
    %203 = vmatprep.subr.bf16.mxu0 0
    %204 = vmatpush1.bf16.msra.mxu0 %v129
    %205 = vmatprep.subr.bf16.mxu0 0
    %206 = vmatpush1.bf16.msra.mxu0 %v130
    %207 = vmatprep.subr.bf16.mxu0 0
    %208 = vmatpush1.bf16.msra.mxu0 %v131
    %209 = vmatprep.subr.bf16.mxu0 0
    %210 = vmatpush1.bf16.msra.mxu0 %v132
    %211 = vmatprep.subr.bf16.mxu0 0
    %212 = vmatpush1.bf16.msra.mxu0 %v133
    %213 = vmatprep.subr.bf16.mxu0 0
    %214 = vmatpush1.bf16.msra.mxu0 %v134
    %215 = vmatprep.subr.bf16.mxu0 0
    %216 = vmatpush1.bf16.msra.mxu0 %v135
    %217 = vmatprep.subr.bf16.mxu0 0
    %218 = vmatpush1.bf16.msra.mxu0 %v136
    %219 = vmatprep.subr.bf16.mxu0 0
    %220 = vmatpush1.bf16.msra.mxu0 %v137
    %221 = vmatprep.subr.bf16.mxu0 0
    %222 = vmatpush1.bf16.msra.mxu0 %v138
    %223 = vmatprep.subr.bf16.mxu0 0
    %224 = vmatpush1.bf16.msra.mxu0 %v139
    %225 = vmatprep.subr.bf16.mxu0 0
    %226 = vmatpush1.bf16.msra.mxu0 %v140
    %227 = vmatprep.subr.bf16.mxu0 0
    %228 = vmatpush1.bf16.msra.mxu0 %v141
    %229 = vmatprep.subr.bf16.mxu0 0
    %230 = vmatpush1.bf16.msra.mxu0 %v142
    %231 = vmatprep.mubr.bf16.mxu0 %v62
    %232 = vmatmul.mubr.bf16.gmra.mrb[0].mxu0 %v61
    %v233 = vpop.f32.mrb[0].mxu0
    %v234 = vadd.f32 0.0, %v233
    %v235 = vpop.f32.mrb[0].mxu0
    %v236 = vpop.f32.mrb[0].mxu0
    %v237 = vpop.f32.mrb[0].mxu0
    %238 = vdwg.mxu0
    %v239 = vmin.f32 %v194, %v234
    %v240 = vlaneseq
    %v241 = vshrl.u32 %v240, 7
    %v242 = vstv %s47
    %v243 = vadd.s32 %v242, %v241
    %vm244 = vcmp.lt.s32.totalorder %v243, 8
    %v245 = vsel %vm244, %v239, 0.0
    %v246 = vld [vmem:[#allocation2] sm:$0x1]
    %vm247 = vcmask 130048
    %v248 = vsel %vm247, %v245, 0.0
    %v249 = vrot.slane %v248, 4
    %v250 = vadd.f32 %v248, %v249
    %v251 = vrot.slane %v250, 2
    %v252 = vadd.f32 %v250, %v251
    %v253 = vrot.slane %v252, 1
    %v254 = vadd.f32 %v252, %v253
    %v255 = vadd.f32 %v246, %v254
    %256 = vst.msk [vmem:[#allocation2] sm:$0x1] %vm13, %v255
    %v257 = vld [vmem:[#allocation2] sm:$0x1]
    %v258 = vsel %vm13, %v257, 0.0
    %259 = vadd.xlane.f32.xlu0 %v258
    %v260 = vpop.xlane.xlu0 %259
    %v261 = vrot.slane %v260, 4
    %v262 = vadd.f32 %v260, %v261
    %v263 = vrot.slane %v262, 2
    %v264 = vadd.f32 %v262, %v263
    %v265 = vrot.slane %v264, 1
    %v266 = vadd.f32 %v264, %v265
    %s267 = vtos %v266
    %s268 = scalar_lea.smem [#allocation3], 0
    %269 = sst [smem:[%s268]] %s267
    // Predicated region
    $region10: #{tpu_custom_call.1} parent=1 // pred_check
      _
    $region11: #{tpu_custom_call.1} parent=1 // pred_check_branch
      %271 = sbr.rel (0) target = $region13
    $region12: #{tpu_custom_call.1} parent=1 // pred_region
      %s273 = ssub.s32 16, 16
      %274 = vsyncadd [#allocation4], %s273
      %277 = dma.smem_to_hbm [#allocation3], 16, %s2, [#allocation4]
    $region13: #{tpu_custom_call.1} parent=1 // pred_fallthru
      _
    // Predicated region
    $region14: #{tpu_custom_call.1} parent=1 // pred_check
      _
    $region15: #{tpu_custom_call.1} parent=1 // pred_check_branch
      %279 = sbr.rel (0) target = $region17
    $region16: #{tpu_custom_call.1} parent=1 // pred_region
      %280 = dma.done [#allocation4], 16
    $region17: #{tpu_custom_call.1} parent=1 // pred_fallthru
      _
    %281 = sfence
    %282 = vsyncpa [#allocation4], 1

</llo_original>
